<compile_context>
chip_gen: v7x
topology: tpu7x:2x2x1
jax: 0.10.0
libtpu: 0.0.40
codegen_flags: <defaults>
</compile_context>

<pallas_src>
import functools

import jax
import jax.numpy as jnp
from jax.experimental import pallas as pl
from jax.experimental.pallas import tpu as pltpu

LANES = 128
_MIB = 1024 * 1024


def _round_up(x, m):
    return ((x + m - 1) // m) * m


def _chip_defaults():
    """Chip-aware defaults: (block_bytes, n_outer_max, min_pallas_elems)."""
    kind = ""
    try:
        kind = jax.devices()[0].device_kind.lower()
    except Exception:  # pragma: no cover - defensive; defaults still valid.
        pass
    is_v7 = "v7" in kind
    block_bytes = (8 if is_v7 else 4) * _MIB      # per-block streaming size
    n_outer_max = 2 if is_v7 else 1               # 2 TCs only on v7x
    min_pallas_elems = (512 if is_v7 else 256) * 1024
    return block_bytes, n_outer_max, min_pallas_elems


def _hinge_sum_kernel(y_ref, out_ref, acc_ref, *, as_real, tile_rows,
                      valid_rows, blocks_total, n_inner):
    """Accumulates sum(relu(1 -/+ y)) into a single (8,128) vreg per outer shard."""
    o = pl.program_id(0)
    i = pl.program_id(1)

    @pl.when(i == 0)
    def _():
        acc_ref[...] = jnp.zeros_like(acc_ref)

    # Upcast the native-dtype tile in-kernel; fold the static sign into the
    # expression (no multiply by +/-1).
    y = y_ref[...].astype(jnp.float32)
    if as_real:
        h = jnp.maximum(1.0 - y, 0.0)
    else:
        h = jnp.maximum(1.0 + y, 0.0)

    def accumulate(hv):
        # Tree-reduce the (tile_rows,128) tile into one vreg and add into the
        # single-vreg accumulator (no full-tile scratch RMW).
        acc_ref[...] += hv.reshape(-1, 8, LANES).sum(axis=0)

    last_block = blocks_total - 1
    ragged = (valid_rows % tile_rows) != 0  # static python bool

    if ragged:
        b = o * n_inner + i  # global block index (no phantom blocks by construction)

        @pl.when(b == last_block)
        def _():
            # Mask rows past the valid extent. Applied AFTER the relu so that
            # NaN/Inf from unspecified padded VMEM contents is discarded.
            rows_in_last = valid_rows - last_block * tile_rows  # static int
            row_ids = jax.lax.broadcasted_iota(jnp.int32, (tile_rows, LANES), 0)
            accumulate(jnp.where(row_ids < rows_in_last, h, 0.0))

        @pl.when(b != last_block)
        def _():
            accumulate(h)
    else:
        accumulate(h)

    @pl.when(i == n_inner - 1)
    def _():
        out_ref[...] = acc_ref[...]  # full (8,128) tile store per outer shard


def _hinge_sum_pallas(y2d, as_real, block_bytes, n_outer_max):
    """Sum of relu(1 -/+ y2d) over a (rows, 128) slab; returns an f32 scalar."""
    rows, lanes = y2d.shape
    assert lanes == LANES

    dt_bytes = jnp.dtype(y2d.dtype).itemsize
    # Size blocks by bytes; keep tile rows a multiple of 32 (valid sublane
    # tiling for f32/bf16/int8) and at least 32.
    max_tile_rows = max(32, (int(block_bytes) // (LANES * dt_bytes)) // 32 * 32)
    tile_rows = min(max_tile_rows, _round_up(rows, 32))

    blocks_total = pl.cdiv(rows, tile_rows)
    # Outer (megacore) split only when it is free: 2-TC chip AND an even
    # number of blocks (never create phantom blocks / forced masking).
    n_outer = 2 if (n_outer_max >= 2 and blocks_total >= 2
                    and blocks_total % 2 == 0) else 1
    n_inner = blocks_total // n_outer

    kernel = functools.partial(
        _hinge_sum_kernel,
        as_real=bool(as_real),
        tile_rows=tile_rows,
        valid_rows=rows,
        blocks_total=blocks_total,
        n_inner=n_inner,
    )

    block_vmem = tile_rows * LANES * dt_bytes
    # Double-buffered input + tiny scratch/output; v5e default scoped VMEM is
    # only 16 MiB so always set this explicitly. Keep headroom under v7x's
    # 64 MiB physical VMEM.
    vmem_limit = int(min(48 * _MIB, max(32 * _MIB, 3 * block_vmem)))

    partial_sums = pl.pallas_call(
        kernel,
        out_shape=jax.ShapeDtypeStruct((n_outer * 8, LANES), jnp.float32),
        grid_spec=pltpu.PrefetchScalarGridSpec(
            num_scalar_prefetch=0,
            grid=(n_outer, n_inner),
            in_specs=[pl.BlockSpec((tile_rows, LANES),
                                   lambda o, i: (o * n_inner + i, 0))],
            out_specs=pl.BlockSpec((8, LANES), lambda o, i: (o, 0)),
            scratch_shapes=[pltpu.VMEM((8, LANES), jnp.float32)],
        ),
        compiler_params=pltpu.CompilerParams(
            dimension_semantics=("parallel", "arbitrary"),
            vmem_limit_bytes=vmem_limit,
        ),
    )(y2d)

    # Tiny (n_outer*8, 128) reduction finished in plain JAX.
    return jnp.sum(partial_sums)


def gan_hinge_d_loss(y, as_real=True, *, block_bytes=None,
                     min_pallas_elems=None, n_outer_max=None):
    """Pallas equivalent of GANHingeLoss.forward(y, as_real). Returns f32 scalar."""
    dflt_block_bytes, dflt_n_outer_max, dflt_thresh = _chip_defaults()
    if block_bytes is None:
        block_bytes = dflt_block_bytes
    if min_pallas_elems is None:
        min_pallas_elems = dflt_thresh
    if n_outer_max is None:
        n_outer_max = dflt_n_outer_max

    n_total = y.size

    # Small-input fast path: pallas_call launch overhead dominates; let XLA's
    # fused relu+reduce handle it. (Disabled in the self-test so the kernel
    # itself is exercised.)
    if n_total < max(int(min_pallas_elems), LANES):
        yf32 = y.astype(jnp.float32)
        h = jnp.maximum(1.0 - yf32, 0.0) if as_real else jnp.maximum(1.0 + yf32, 0.0)
        return jnp.mean(h)

    yf = y.reshape(-1)                      # free for contiguous inputs
    rows = n_total // LANES
    rem = n_total - rows * LANES

    if rem == 0:
        total = _hinge_sum_pallas(yf.reshape(rows, LANES), as_real,
                                  block_bytes, n_outer_max)
    else:
        # Bulk handled by the kernel, sub-128-element tail in plain JAX.
        main = yf[: rows * LANES].reshape(rows, LANES)
        tail = yf[rows * LANES:].astype(jnp.float32)
        total = _hinge_sum_pallas(main, as_real, block_bytes, n_outer_max)
        tail_h = jnp.maximum(1.0 - tail, 0.0) if as_real else jnp.maximum(1.0 + tail, 0.0)
        total = total + jnp.sum(tail_h)

    return total / jnp.float32(n_total)


def gan_hinge_g_loss(y):
    """G_loss(y) = -mean(y) (plain JAX glue; not the hot path of forward)."""
    return -jnp.mean(y.astype(jnp.float32))


def _ref_d_loss(y, as_real=True):
    y = y.astype(jnp.float32)
    if as_real:
        return jnp.mean(jax.nn.relu(1.0 - y))
    return jnp.mean(jax.nn.relu(1.0 + y))


if __name__ == "__main__":
    key = jax.random.PRNGKey(0)

    # Discriminator output, NCHW-like small shape (2048 elems = 16 rows of 128).
    y = jax.random.normal(key, (2, 4, 16, 16), dtype=jnp.float32)

    # Force the Pallas path even at this small size so the kernel is exercised
    # (single ragged block of 32 rows, masked boundary branch).
    out_real = jax.block_until_ready(gan_hinge_d_loss(y, True, min_pallas_elems=0))
    out_fake = jax.block_until_ready(gan_hinge_d_loss(y, False, min_pallas_elems=0))
    ref_real = _ref_d_loss(y, True)
    ref_fake = _ref_d_loss(y, False)
    assert jnp.allclose(out_real, ref_real, rtol=1e-5, atol=1e-5), (out_real, ref_real)
    assert jnp.allclose(out_fake, ref_fake, rtol=1e-5, atol=1e-5), (out_fake, ref_fake)

    # bf16 input: native-dtype streaming + in-kernel f32 upcast.
    yb = y.astype(jnp.bfloat16)
    out_b = jax.block_until_ready(gan_hinge_d_loss(yb, True, min_pallas_elems=0))
    ref_b = _ref_d_loss(yb, True)
    assert jnp.allclose(out_b, ref_b, rtol=1e-4, atol=1e-5), (out_b, ref_b)

    # Multi-block grid with a ragged boundary block (80 rows, 32-row tiles ->
    # 3 blocks, last has 16 valid rows); exercises the gated-mask branches.
    y2 = jax.random.normal(jax.random.PRNGKey(1), (2, 5, 32, 32), dtype=jnp.float32)
    out2 = jax.block_until_ready(
        gan_hinge_d_loss(y2, True, block_bytes=32 * LANES * 4, min_pallas_elems=0))
    ref2 = _ref_d_loss(y2, True)
    assert jnp.allclose(out2, ref2, rtol=1e-5, atol=1e-5), (out2, ref2)

    # Even block count with a forced 2-way outer split (64 rows, 32-row tiles):
    # exercises the megacore-style (2, n_inner) grid path on any chip.
    y4 = jax.random.normal(jax.random.PRNGKey(3), (2, 4, 32, 32), dtype=jnp.float32)
    out4 = jax.block_until_ready(
        gan_hinge_d_loss(y4, False, block_bytes=32 * LANES * 4,
                         min_pallas_elems=0, n_outer_max=2))
    ref4 = _ref_d_loss(y4, False)
    assert jnp.allclose(out4, ref4, rtol=1e-5, atol=1e-5), (out4, ref4)

    # Size not divisible by 128 (5400 elems): kernel bulk + plain-JAX tail.
    y3 = jax.random.normal(jax.random.PRNGKey(2), (2, 3, 30, 30), dtype=jnp.float32)
    out3 = jax.block_until_ready(gan_hinge_d_loss(y3, False, min_pallas_elems=0))
    ref3 = _ref_d_loss(y3, False)
    assert jnp.allclose(out3, ref3, rtol=1e-5, atol=1e-5), (out3, ref3)

    # Default small-input fast path (no kernel launch).
    out_fast = jax.block_until_ready(gan_hinge_d_loss(y, True))
    assert jnp.allclose(out_fast, ref_real, rtol=1e-5, atol=1e-5), (out_fast, ref_real)

    print("KERNEL_OK")
</pallas_src>

<mosaic_0001>
module attributes {stable_mosaic.version = 11 : i64} {
  func.func @_hinge_sum_kernel(%arg0: i32, %arg1: i32, %arg2: memref<32x128xf32, #tpu.memory_space<vmem>>, %arg3: memref<8x128xf32, #tpu.memory_space<vmem>>, %arg4: memref<8x128xf32, #tpu.memory_space<vmem>>) attributes {dimension_semantics = [#tpu.dimension_semantics<parallel>, #tpu.dimension_semantics<arbitrary>], iteration_bounds = array<i64: 1, 1>, scalar_prefetch = 0 : i64, scratch_operands = 1 : i64, tpu.core_type = #tpu.core_type<tc>, window_params = [{transform_indices = @transform_0, window_bounds = array<i64: 32, 128>}, {transform_indices = @transform_1, window_bounds = array<i64: 8, 128>}]} {
    %c0_i32 = arith.constant 0 : i32
    %0 = arith.cmpi eq, %arg1, %c0_i32 : i32
    %1 = arith.extui %0 : i1 to i32
    %c0_i32_0 = arith.constant 0 : i32
    %2 = arith.cmpi ne, %1, %c0_i32_0 : i32
    scf.if %2 {
      %cst_9 = arith.constant 0.000000e+00 : f32
      %19 = vector.broadcast %cst_9 : f32 to vector<8x128xf32>
      %c0_10 = arith.constant 0 : index
      %c0_11 = arith.constant 0 : index
      %20 = vector.load %arg4[%c0_10, %c0_11] : memref<8x128xf32, #tpu.memory_space<vmem>>, vector<8x128xf32>
      tpu.vector_store %arg4[%c0_10, %c0_11], %19 {strides = array<i32>} : memref<8x128xf32, #tpu.memory_space<vmem>>, vector<8x128xf32>,
    } else {
    }
    %c0 = arith.constant 0 : index
    %c0_1 = arith.constant 0 : index
    %3 = vector.load %arg2[%c0, %c0_1] : memref<32x128xf32, #tpu.memory_space<vmem>>, vector<32x128xf32>
    %cst = arith.constant 1.000000e+00 : f32
    %4 = vector.broadcast %cst : f32 to vector<32x128xf32>
    %5 = arith.subf %4, %3 : vector<32x128xf32>
    %cst_2 = arith.constant 0.000000e+00 : f32
    %6 = vector.broadcast %cst_2 : f32 to vector<32x128xf32>
    %7 = arith.maximumf %5, %6 : vector<32x128xf32>
    %c1_i32 = arith.constant 1 : i32
    %8 = arith.muli %arg0, %c1_i32 : i32
    %9 = arith.addi %8, %arg1 : i32
    %c0_i32_3 = arith.constant 0 : i32
    %10 = arith.cmpi eq, %9, %c0_i32_3 : i32
    %11 = arith.extui %10 : i1 to i32
    %c0_i32_4 = arith.constant 0 : i32
    %12 = arith.cmpi ne, %11, %c0_i32_4 : i32
    scf.if %12 {
      %19 = tpu.iota {dimensions = array<i32: 0>} : vector<32x128xi32>
      %c16_i32 = arith.constant 16 : i32
      %20 = vector.broadcast %c16_i32 : i32 to vector<32x128xi32>
      %21 = arith.cmpi slt, %19, %20 : vector<32x128xi32>
      %cst_9 = arith.constant 0.000000e+00 : f32
      %22 = vector.broadcast %cst_9 : f32 to vector<32x128xf32>
      %23 = arith.select %21, %7, %22 : vector<32x128xi1>, vector<32x128xf32>
      %c0_10 = arith.constant 0 : index
      %c0_11 = arith.constant 0 : index
      %24 = vector.load %arg4[%c0_10, %c0_11] : memref<8x128xf32, #tpu.memory_space<vmem>>, vector<8x128xf32>
      %25 = vector.shape_cast %23 : vector<32x128xf32> to vector<4x8x128xf32>
      %cst_12 = arith.constant dense<0.000000e+00> : vector<8x128xf32>
      %26 = vector.multi_reduction <add>, %25, %cst_12 [0] : vector<4x8x128xf32> to vector<8x128xf32>
      %27 = arith.addf %24, %26 : vector<8x128xf32>
      %c0_13 = arith.constant 0 : index
      %c0_14 = arith.constant 0 : index
      %28 = vector.load %arg4[%c0_13, %c0_14] : memref<8x128xf32, #tpu.memory_space<vmem>>, vector<8x128xf32>
      tpu.vector_store %arg4[%c0_13, %c0_14], %27 {strides = array<i32>} : memref<8x128xf32, #tpu.memory_space<vmem>>, vector<8x128xf32>,
    } else {
    }
    %c0_i32_5 = arith.constant 0 : i32
    %13 = arith.cmpi ne, %9, %c0_i32_5 : i32
    %14 = arith.extui %13 : i1 to i32
    %c0_i32_6 = arith.constant 0 : i32
    %15 = arith.cmpi ne, %14, %c0_i32_6 : i32
    scf.if %15 {
      %c0_9 = arith.constant 0 : index
      %c0_10 = arith.constant 0 : index
      %19 = vector.load %arg4[%c0_9, %c0_10] : memref<8x128xf32, #tpu.memory_space<vmem>>, vector<8x128xf32>
      %20 = vector.shape_cast %7 : vector<32x128xf32> to vector<4x8x128xf32>
      %cst_11 = arith.constant dense<0.000000e+00> : vector<8x128xf32>
      %21 = vector.multi_reduction <add>, %20, %cst_11 [0] : vector<4x8x128xf32> to vector<8x128xf32>
      %22 = arith.addf %19, %21 : vector<8x128xf32>
      %c0_12 = arith.constant 0 : index
      %c0_13 = arith.constant 0 : index
      %23 = vector.load %arg4[%c0_12, %c0_13] : memref<8x128xf32, #tpu.memory_space<vmem>>, vector<8x128xf32>
      tpu.vector_store %arg4[%c0_12, %c0_13], %22 {strides = array<i32>} : memref<8x128xf32, #tpu.memory_space<vmem>>, vector<8x128xf32>,
    } else {
    }
    %c0_i32_7 = arith.constant 0 : i32
    %16 = arith.cmpi eq, %arg1, %c0_i32_7 : i32
    %17 = arith.extui %16 : i1 to i32
    %c0_i32_8 = arith.constant 0 : i32
    %18 = arith.cmpi ne, %17, %c0_i32_8 : i32
    scf.if %18 {
      %c0_9 = arith.constant 0 : index
      %c0_10 = arith.constant 0 : index
      %19 = vector.load %arg4[%c0_9, %c0_10] : memref<8x128xf32, #tpu.memory_space<vmem>>, vector<8x128xf32>
      %c0_11 = arith.constant 0 : index
      %c0_12 = arith.constant 0 : index
      %20 = vector.load %arg3[%c0_11, %c0_12] : memref<8x128xf32, #tpu.memory_space<vmem>>, vector<8x128xf32>
      tpu.vector_store %arg3[%c0_11, %c0_12], %19 {strides = array<i32>} : memref<8x128xf32, #tpu.memory_space<vmem>>, vector<8x128xf32>,
    } else {
    }
    return
  }
  func.func @transform_0(%arg0: i32, %arg1: i32) -> (i32, i32) {
    %c1_i32 = arith.constant 1 : i32
    %0 = arith.muli %arg0, %c1_i32 : i32
    %1 = arith.addi %0, %arg1 : i32
    %c0_i32 = arith.constant 0 : i32
    %c0_i32_0 = arith.constant 0 : i32
    return %1, %c0_i32 : i32, i32
  }
  func.func @transform_1(%arg0: i32, %arg1: i32) -> (i32, i32) {
    %c0_i32 = arith.constant 0 : i32
    %c0_i32_0 = arith.constant 0 : i32
    return %arg0, %c0_i32 : i32, i32
  }
}

</mosaic_0001>

<llo_original>
// kernel: tpu_custom_call.1
$region0: #{tpu_custom_call.1}
  #allocation0 [shape = 'u32[]', space=smem, size = 0x4, offset = 0x4, fixed_abs, tag = 'smem constant byte address 0x4 - core index']
  #allocation1 [shape = 'u32[144,128]{1,0:T(1,128)}', space=vmem, size = 0x12000, scoped, tag = 'internal scratch']
  #allocation2 [shape = 'f32[8,128]{1,0:T(8,128)}', space=vmem, size = 0x1000, scoped, tag = 'scratch operand']
  %s0 = inlined_call_operand.hbm [shape: f32[16,128], index: 0, kind: input, shape index: {}]
  %s1 = inlined_call_operand.hbm [shape: f32[8,128], index: 1, kind: output, shape index: {}]
  %s2 = sld [smem:[#allocation0]]
  $region34: #{tpu_custom_call.1} parent=0
    _
  %s4 = ssub.s32 1, %s2
  %s5 = scalar_select 0, %s4, %s2
  $region1: #{tpu_custom_call.1} parent=0
    #allocation3 [shape = 'u8[16384]{0}', space=vmem, size = 0x4000, scoped, tag = 'input window, operand 0, single buffered']
    #allocation4 [shape = 's32[1]{0}', space=sflag, size = 0x4, scoped, tag = 'scoped memory for tpu_custom_call.1']
    #allocation5 [shape = 's32[1]{0}', space=sflag, size = 0x4, scoped, tag = 'scoped memory for tpu_custom_call.1']
    #allocation6 [shape = 'u8[4096]{0}', space=vmem, size = 0x1000, scoped, tag = 'output window, operand 0, single buffered']
    %6 = vsyncpa [#allocation4], 0
    %7 = vsyncpa [#allocation5], 0
    // Predicated region
    $region2: #{tpu_custom_call.1} parent=1 // pred_check
      _
    $region3: #{tpu_custom_call.1} parent=1 // pred_check_branch
      %9 = sbr.rel (0) target = $region5
    $region4: #{tpu_custom_call.1} parent=1 // pred_region
      %s10 = sadd.s32 0, 0
      %s11 = smul.u32 4, %s10
      %s12 = ssub.s32 2, %s11
      %s13 = smul.u32 128, %s12
      %s15 = ssub.s32 512, %s13
      %16 = vsyncadd [#allocation4], %s15
      %p17 = scmp.ne.s32.totalorder 0, %s13
      %s18 = smul.addr %s11, 128
      %s19 = scalar_lea.hbm %s0, %s18
      %s20 = smul.u32 8, %s12
      %s21 = sshll.u32 [#allocation3], 4
      %s22 = int_to_ptr.vmem [resolvable:$true] %s21
      %s23 = sshll.u32 %s20, 4
      %27 = dma.hbm_to_vmem [thread:$0]  (%p17), %s19, %s23, %s22, [#allocation4], 128, 128, 8
    $region5: #{tpu_custom_call.1} parent=1 // pred_fallthru
      _
    // Predicated region
    $region6: #{tpu_custom_call.1} parent=1 // pred_check
      _
    $region7: #{tpu_custom_call.1} parent=1 // pred_check_branch
      %29 = sbr.rel (0) target = $region9
    $region8: #{tpu_custom_call.1} parent=1 // pred_region
      %30 = dma.done [#allocation4], 512
    $region9: #{tpu_custom_call.1} parent=1 // pred_fallthru
      _
    %s31 = sadd.s32 0, 0
    %s32 = smul.u32 4, %s31
    %s33 = ssub.s32 2, %s32
    %s34 = smul.u32 128, %s33
    %p35 = scmp.eq.s32.totalorder 0, 0
    // Predicated region
    $region10: #{tpu_custom_call.1} parent=1 // pred_check
      %p36 = pneg %p35
    $region11: #{tpu_custom_call.1} parent=1 // pred_check_branch
      %38 = sbr.rel (%p36) target = $region13
    $region12: #{tpu_custom_call.1} parent=1 // pred_region
      %39 = vst [vmem:[#allocation2] sm:$0xff] 0.0
    $region13: #{tpu_custom_call.1} parent=1 // pred_fallthru
      _
    %v40 = vld [vmem:[#allocation3] sm:$0xff]
    %v41 = vld [vmem:[#allocation3 + $0x8] sm:$0xff]
    %v42 = vld [vmem:[#allocation3 + $0x10] sm:$0xff]
    %v43 = vld [vmem:[#allocation3 + $0x18] sm:$0xff]
    %v44 = vsub.f32 1.0, %v40
    %v45 = vsub.f32 1.0, %v41
    %v46 = vsub.f32 1.0, %v42
    %v47 = vsub.f32 1.0, %v43
    %v48 = vmax.f32 %v44, 0.0
    %v49 = vmax.f32 %v45, 0.0
    %v50 = vmax.f32 %v46, 0.0
    %v51 = vmax.f32 %v47, 0.0
    %s52 = sadd.s32 0, 0
    %p53 = scmp.eq.s32.totalorder %s52, 0
    // Predicated region
    $region14: #{tpu_custom_call.1} parent=1 // pred_check
      %p54 = pneg %p53
    $region15: #{tpu_custom_call.1} parent=1 // pred_check_branch
      %56 = sbr.rel (%p54) target = $region17
    $region16: #{tpu_custom_call.1} parent=1 // pred_region
      %v57 = vlaneseq
      %v58 = vshrl.u32 %v57, 7
      %v59 = vadd.s32 %v58, 8
      %v60 = vadd.s32 %v58, 16
      %v61 = vadd.s32 %v58, 24
      %vm62 = vcmp.lt.s32.totalorder %v58, 16
      %vm63 = vcmp.lt.s32.totalorder %v59, 16
      %vm64 = vcmp.lt.s32.totalorder %v60, 16
      %vm65 = vcmp.lt.s32.totalorder %v61, 16
      %v66 = vsel %vm62, %v48, 0.0
      %v67 = vsel %vm63, %v49, 0.0
      %v68 = vsel %vm64, %v50, 0.0
      %v69 = vsel %vm65, %v51, 0.0
      %v70 = vld [vmem:[#allocation2] sm:$0xff]
      %v71 = vadd.f32 %v66, %v67
      %v72 = vadd.f32 %v71, %v68
      %v73 = vadd.f32 %v72, %v69
      %v74 = vadd.f32 %v70, %v73
      %75 = vst [vmem:[#allocation2] sm:$0xff] %v74
    $region17: #{tpu_custom_call.1} parent=1 // pred_fallthru
      _
    %p76 = scmp.ne.s32.totalorder %s52, 0
    // Predicated region
    $region18: #{tpu_custom_call.1} parent=1 // pred_check
      %p77 = pneg %p76
    $region19: #{tpu_custom_call.1} parent=1 // pred_check_branch
      %79 = sbr.rel (%p77) target = $region21
    $region20: #{tpu_custom_call.1} parent=1 // pred_region
      %v80 = vld [vmem:[#allocation2] sm:$0xff]
      %v81 = vadd.f32 %v48, %v49
      %v82 = vadd.f32 %v81, %v50
      %v83 = vadd.f32 %v82, %v51
      %v84 = vadd.f32 %v80, %v83
      %85 = vst [vmem:[#allocation2] sm:$0xff] %v84
    $region21: #{tpu_custom_call.1} parent=1 // pred_fallthru
      _
    // Predicated region
    $region22: #{tpu_custom_call.1} parent=1 // pred_check
      %p86 = pneg %p35
    $region23: #{tpu_custom_call.1} parent=1 // pred_check_branch
      %88 = sbr.rel (%p86) target = $region25
    $region24: #{tpu_custom_call.1} parent=1 // pred_region
      %v89 = vld [vmem:[#allocation2] sm:$0xff]
      %90 = vst [vmem:[#allocation6] sm:$0xff] %v89
    $region25: #{tpu_custom_call.1} parent=1 // pred_fallthru
      _
    // Predicated region
    $region26: #{tpu_custom_call.1} parent=1 // pred_check
      _
    $region27: #{tpu_custom_call.1} parent=1 // pred_check_branch
      %92 = sbr.rel (0) target = $region29
    $region28: #{tpu_custom_call.1} parent=1 // pred_region
      %s94 = ssub.s32 128, 128
      %95 = vsyncadd [#allocation5], %s94
      %s97 = sshll.u32 [#allocation6], 4
      %s98 = int_to_ptr.vmem [resolvable:$true] %s97
      %100 = dma.vmem_to_hbm [thread:$0]  %s98, 128, %s1, [#allocation5]
    $region29: #{tpu_custom_call.1} parent=1 // pred_fallthru
      _
    // Predicated region
    $region30: #{tpu_custom_call.1} parent=1 // pred_check
      _
    $region31: #{tpu_custom_call.1} parent=1 // pred_check_branch
      %102 = sbr.rel (0) target = $region33
    $region32: #{tpu_custom_call.1} parent=1 // pred_region
      %103 = dma.done [#allocation5], 128
    $region33: #{tpu_custom_call.1} parent=1 // pred_fallthru
      _
    %104 = vsyncpa [#allocation4], 1
    %105 = vsyncpa [#allocation5], 1

</llo_original>
